<compile_context>
chip_gen: v7x
topology: tpu7x:2x2x1
jax: 0.10.0
libtpu: 0.0.40
codegen_flags: <defaults>
</compile_context>

<pallas_src>
import functools

import jax
import jax.numpy as jnp
from jax.experimental import pallas as pl
from jax.experimental.pallas import tpu as pltpu

LANES = 128
TARGET_BLOCK_BYTES = 8 << 20   # per input, per pipeline buffer
NUM_CHUNKS = 2                 # megacore split on v7x; serial loop elsewhere


def _sublane_align(dtype) -> int:
    # Sublane-tile row alignment: f32 -> 8, bf16 -> 16, int8 -> 32.
    return max(8, 32 // max(1, jnp.dtype(dtype).itemsize))


def _iou_kernel(pred_ref, label_ref, out_ref, iand_acc, sum_acc,
                *, total_rows: int, blocks_per_chunk: int,
                blocks_total: int, need_mask: bool):
    c = pl.program_id(0)   # parallel chunk (TensorCore on v7x)
    k = pl.program_id(1)   # reduction step within the chunk

    @pl.when(k == 0)
    def _init():
        iand_acc[...] = jnp.zeros_like(iand_acc)
        sum_acc[...] = jnp.zeros_like(sum_acc)

    p = pred_ref[...].astype(jnp.float32)
    l = label_ref[...].astype(jnp.float32)
    block_rows = p.shape[0]

    prod = l * p          # -> Iand
    both = l + p          # -> sum(l) + sum(p)

    def _accumulate(prod_v, both_v):
        # Fold (block_rows, 128) down to one (8, 128) vreg per accumulator with
        # pure VPU adds (block_rows is always a multiple of 8).
        iand_acc[...] += jnp.sum(prod_v.reshape(-1, 8, LANES), axis=0)
        sum_acc[...] += jnp.sum(both_v.reshape(-1, 8, LANES), axis=0)

    if need_mask:
        # Linear (unclamped) block index of this step; may point past the last
        # real block when the block count does not split evenly across chunks.
        b = c * blocks_per_chunk + k
        row_start = b * block_rows
        is_full = row_start + block_rows <= total_rows

        @pl.when(is_full)
        def _hot():                     # steady state: no mask cost
            _accumulate(prod, both)

        @pl.when(jnp.logical_not(is_full))
        def _edge():                    # boundary / virtual block only
            row_ids = row_start + jax.lax.broadcasted_iota(
                jnp.int32, prod.shape, 0)
            valid = row_ids < total_rows
            _accumulate(jnp.where(valid, prod, 0.0),
                        jnp.where(valid, both, 0.0))
    else:
        _accumulate(prod, both)

    @pl.when(k == pl.num_programs(1) - 1)
    def _finalize():
        # Per-chunk partials; the (cheap) combine + divide happen in the
        # wrapper so the two v7x cores never race on a shared output.
        out_ref[0, 0] = jnp.sum(iand_acc[...])
        out_ref[0, 1] = jnp.sum(sum_acc[...])


def iou_loss(img_predict: jax.Array, img_label: jax.Array,
             *, block_rows_override: int | None = None) -> jax.Array:
    """Equivalent of IoU.forward: 1 - sum(l*p) / (sum(l) + sum(p) - sum(l*p))."""
    assert img_predict.shape == img_label.shape

    # Flatten in native dtype (no wrapper-side cast -> no extra HBM pass).
    p_flat = img_predict.reshape(-1)
    l_flat = img_label.reshape(-1)
    n = p_flat.shape[0]

    p_item = jnp.dtype(p_flat.dtype).itemsize
    l_item = jnp.dtype(l_flat.dtype).itemsize
    align = max(_sublane_align(p_flat.dtype), _sublane_align(l_flat.dtype))

    # Pad so the flat arrays reshape to (rows, 128) with rows % align == 0.
    # Zero padding is neutral for all three sums; only triggers for odd sizes.
    chunk = LANES * align
    n_pad = ((n + chunk - 1) // chunk) * chunk
    if n_pad != n:
        # TODO(synk): feed the raw 1D arrays and mask on a flat element index
        # in-kernel to avoid this extra HBM pass for odd-sized inputs.
        p_flat = jnp.pad(p_flat, (0, n_pad - n))
        l_flat = jnp.pad(l_flat, (0, n_pad - n))

    rows = n_pad // LANES
    p2d = p_flat.reshape(rows, LANES)           # free: layout-compatible view
    l2d = l_flat.reshape(rows, LANES)

    # Dtype-aware block rows: constant ~TARGET_BLOCK_BYTES per input block.
    if block_rows_override is not None:         # testing hook
        max_rows = max(align, (block_rows_override // align) * align)
    else:
        max_item = max(p_item, l_item)
        max_rows = max(align,
                       (TARGET_BLOCK_BYTES // (LANES * max_item)) // align * align)
    block_rows = min(max_rows, rows)            # multiple of align, or = rows

    blocks_total = -(-rows // block_rows)
    num_chunks = NUM_CHUNKS if blocks_total >= NUM_CHUNKS else 1
    blocks_per_chunk = -(-blocks_total // num_chunks)
    need_mask = (rows % block_rows != 0) or (
        num_chunks * blocks_per_chunk != blocks_total)

    def in_index_map(c, k):
        b = c * blocks_per_chunk + k
        # Clamp so the (rare) virtual tail block never DMAs out of bounds; its
        # contribution is masked to zero in-kernel.
        return (jnp.minimum(b, blocks_total - 1), 0)

    kernel = functools.partial(
        _iou_kernel,
        total_rows=rows,
        blocks_per_chunk=blocks_per_chunk,
        blocks_total=blocks_total,
        need_mask=need_mask)

    # VMEM budget: 2 inputs x 2 pipeline buffers x block bytes, +25% headroom,
    # floored at the 32 MiB default and capped at v7x's 64 MiB/TC physical.
    buffer_bytes = 2 * block_rows * LANES * (p_item + l_item)
    vmem_limit = min(max(int(buffer_bytes * 1.25) + (4 << 20), 32 << 20),
                     64 << 20)

    partials = pl.pallas_call(
        kernel,
        out_shape=jax.ShapeDtypeStruct((num_chunks, 2), jnp.float32),
        grid_spec=pltpu.PrefetchScalarGridSpec(
            num_scalar_prefetch=0,
            grid=(num_chunks, blocks_per_chunk),
            in_specs=[
                pl.BlockSpec((block_rows, LANES), in_index_map),
                pl.BlockSpec((block_rows, LANES), in_index_map),
            ],
            out_specs=pl.BlockSpec(
                (1, 2), lambda c, k: (c, 0), memory_space=pltpu.SMEM
            ),
            scratch_shapes=[
                pltpu.VMEM((8, LANES), jnp.float32),  # Iand accumulator
                pltpu.VMEM((8, LANES), jnp.float32),  # sum(l) + sum(p) acc.
            ],
        ),
        compiler_params=pltpu.CompilerParams(
            dimension_semantics=("parallel", "arbitrary"),
            vmem_limit_bytes=vmem_limit,
        ),
    )(p2d, l2d)

    iand = jnp.sum(partials[:, 0])
    total = jnp.sum(partials[:, 1])
    ior = total - iand
    # NaN if ior == 0 (both inputs all-zero) — same behavior as the reference.
    return 1.0 - iand / ior


def _iou_ref(img_predict, img_label):
    p = img_predict.astype(jnp.float32)
    l = img_label.astype(jnp.float32)
    iand = jnp.sum(l * p)
    ior = jnp.sum(l) + jnp.sum(p) - iand
    return 1.0 - iand / ior


if __name__ == "__main__":
    key = jax.random.PRNGKey(0)
    k1, k2, k3, k4, k5, k6 = jax.random.split(key, 6)

    # NCHW prediction/label maps: batch=2, channels=4, spatial=16x16.
    shape = (2, 4, 16, 16)
    img_predict = jax.random.uniform(k1, shape, dtype=jnp.float32)
    img_label = (jax.random.uniform(k2, shape, dtype=jnp.float32) > 0.5).astype(
        jnp.float32)
    loss = jax.block_until_ready(iou_loss(img_predict, img_label))
    ref = _iou_ref(img_predict, img_label)
    assert jnp.allclose(loss, ref, rtol=1e-5, atol=1e-6), (loss, ref)

    # Odd-sized shape: exercises the lane-pad fallback path.
    shape2 = (1, 3, 17, 19)
    p2 = jax.random.uniform(k3, shape2, dtype=jnp.float32)
    l2 = (jax.random.uniform(k4, shape2, dtype=jnp.float32) > 0.5).astype(
        jnp.float32)
    loss2 = jax.block_until_ready(iou_loss(p2, l2))
    ref2 = _iou_ref(p2, l2)
    assert jnp.allclose(loss2, ref2, rtol=1e-5, atol=1e-6), (loss2, ref2)

    # Multi-block + 2-chunk path with an odd block count and a partial last
    # block (small block_rows_override keeps the test shape tiny).
    shape3 = (2, 4, 16, 40)   # 5120 elements -> 40 rows of 128
    p3 = jax.random.uniform(k5, shape3, dtype=jnp.float32)
    l3 = (jax.random.uniform(k6, shape3, dtype=jnp.float32) > 0.5).astype(
        jnp.float32)
    loss3 = jax.block_until_ready(iou_loss(p3, l3, block_rows_override=16))
    ref3 = _iou_ref(p3, l3)
    assert jnp.allclose(loss3, ref3, rtol=1e-5, atol=1e-6), (loss3, ref3)

    # bf16 prediction / f32 label: exercises the in-kernel cast path.
    p4 = jax.random.uniform(k1, shape, dtype=jnp.float32).astype(jnp.bfloat16)
    loss4 = jax.block_until_ready(iou_loss(p4, img_label))
    ref4 = _iou_ref(p4, img_label)
    assert jnp.allclose(loss4, ref4, rtol=1e-5, atol=1e-6), (loss4, ref4)

    print("KERNEL_OK")
</pallas_src>

<mosaic_0001>
module attributes {stable_mosaic.version = 11 : i64} {
  func.func @_iou_kernel(%arg0: i32, %arg1: i32, %arg2: memref<16x128xf32, #tpu.memory_space<vmem>>, %arg3: memref<16x128xf32, #tpu.memory_space<vmem>>, %arg4: memref<1x2xf32, #tpu.memory_space<smem>>, %arg5: memref<8x128xf32, #tpu.memory_space<vmem>>, %arg6: memref<8x128xf32, #tpu.memory_space<vmem>>) attributes {dimension_semantics = [#tpu.dimension_semantics<parallel>, #tpu.dimension_semantics<arbitrary>], iteration_bounds = array<i64: 1, 1>, scalar_prefetch = 0 : i64, scratch_operands = 2 : i64, tpu.core_type = #tpu.core_type<tc>, window_params = [{transform_indices = @transform_0, window_bounds = array<i64: 16, 128>}, {transform_indices = @transform_1, window_bounds = array<i64: 16, 128>}, {transform_indices = @transform_2, window_bounds = array<i64: 1, 2>}]} {
    %c0_i32 = arith.constant 0 : i32
    %0 = arith.cmpi eq, %arg1, %c0_i32 : i32
    %1 = arith.extui %0 : i1 to i32
    %c0_i32_0 = arith.constant 0 : i32
    %2 = arith.cmpi ne, %1, %c0_i32_0 : i32
    scf.if %2 {
      %cst_15 = arith.constant 0.000000e+00 : f32
      %20 = vector.broadcast %cst_15 : f32 to vector<8x128xf32>
      %c0_16 = arith.constant 0 : index
      %c0_17 = arith.constant 0 : index
      %21 = vector.load %arg5[%c0_16, %c0_17] : memref<8x128xf32, #tpu.memory_space<vmem>>, vector<8x128xf32>
      tpu.vector_store %arg5[%c0_16, %c0_17], %20 {strides = array<i32>} : memref<8x128xf32, #tpu.memory_space<vmem>>, vector<8x128xf32>,
      %cst_18 = arith.constant 0.000000e+00 : f32
      %22 = vector.broadcast %cst_18 : f32 to vector<8x128xf32>
      %c0_19 = arith.constant 0 : index
      %c0_20 = arith.constant 0 : index
      %23 = vector.load %arg6[%c0_19, %c0_20] : memref<8x128xf32, #tpu.memory_space<vmem>>, vector<8x128xf32>
      tpu.vector_store %arg6[%c0_19, %c0_20], %22 {strides = array<i32>} : memref<8x128xf32, #tpu.memory_space<vmem>>, vector<8x128xf32>,
    } else {
    }
    %c0 = arith.constant 0 : index
    %c0_1 = arith.constant 0 : index
    %3 = vector.load %arg2[%c0, %c0_1] : memref<16x128xf32, #tpu.memory_space<vmem>>, vector<16x128xf32>
    %c0_2 = arith.constant 0 : index
    %c0_3 = arith.constant 0 : index
    %4 = vector.load %arg3[%c0_2, %c0_3] : memref<16x128xf32, #tpu.memory_space<vmem>>, vector<16x128xf32>
    %5 = arith.mulf %4, %3 : vector<16x128xf32>
    %6 = arith.addf %4, %3 : vector<16x128xf32>
    %c0_4 = arith.constant 0 : index
    %c0_5 = arith.constant 0 : index
    %7 = vector.load %arg5[%c0_4, %c0_5] : memref<8x128xf32, #tpu.memory_space<vmem>>, vector<8x128xf32>
    %8 = vector.shape_cast %5 : vector<16x128xf32> to vector<2x8x128xf32>
    %cst = arith.constant dense<0.000000e+00> : vector<8x128xf32>
    %9 = vector.multi_reduction <add>, %8, %cst [0] : vector<2x8x128xf32> to vector<8x128xf32>
    %10 = arith.addf %7, %9 : vector<8x128xf32>
    %c0_6 = arith.constant 0 : index
    %c0_7 = arith.constant 0 : index
    %11 = vector.load %arg5[%c0_6, %c0_7] : memref<8x128xf32, #tpu.memory_space<vmem>>, vector<8x128xf32>
    tpu.vector_store %arg5[%c0_6, %c0_7], %10 {strides = array<i32>} : memref<8x128xf32, #tpu.memory_space<vmem>>, vector<8x128xf32>,
    %c0_8 = arith.constant 0 : index
    %c0_9 = arith.constant 0 : index
    %12 = vector.load %arg6[%c0_8, %c0_9] : memref<8x128xf32, #tpu.memory_space<vmem>>, vector<8x128xf32>
    %13 = vector.shape_cast %6 : vector<16x128xf32> to vector<2x8x128xf32>
    %cst_10 = arith.constant dense<0.000000e+00> : vector<8x128xf32>
    %14 = vector.multi_reduction <add>, %13, %cst_10 [0] : vector<2x8x128xf32> to vector<8x128xf32>
    %15 = arith.addf %12, %14 : vector<8x128xf32>
    %c0_11 = arith.constant 0 : index
    %c0_12 = arith.constant 0 : index
    %16 = vector.load %arg6[%c0_11, %c0_12] : memref<8x128xf32, #tpu.memory_space<vmem>>, vector<8x128xf32>
    tpu.vector_store %arg6[%c0_11, %c0_12], %15 {strides = array<i32>} : memref<8x128xf32, #tpu.memory_space<vmem>>, vector<8x128xf32>,
    %c0_i32_13 = arith.constant 0 : i32
    %17 = arith.cmpi eq, %arg1, %c0_i32_13 : i32
    %18 = arith.extui %17 : i1 to i32
    %c0_i32_14 = arith.constant 0 : i32
    %19 = arith.cmpi ne, %18, %c0_i32_14 : i32
    scf.if %19 {
      %c0_15 = arith.constant 0 : index
      %c0_16 = arith.constant 0 : index
      %20 = vector.load %arg5[%c0_15, %c0_16] : memref<8x128xf32, #tpu.memory_space<vmem>>, vector<8x128xf32>
      %21 = vector.shape_cast %20 : vector<8x128xf32> to vector<1x8x128xf32>
      %cst_17 = arith.constant dense<0.000000e+00> : vector<1xf32>
      %22 = vector.multi_reduction <add>, %21, %cst_17 [1, 2] : vector<1x8x128xf32> to vector<1xf32>
      %23 = vector.shape_cast %22 : vector<1xf32> to vector<1x1x1xf32>
      %24 = vector.extract %23[0, 0, 0] : f32 from vector<1x1x1xf32>
      %c0_18 = arith.constant 0 : index
      %c0_19 = arith.constant 0 : index
      %25 = memref.load %arg4[%c0_18, %c0_19] : memref<1x2xf32, #tpu.memory_space<smem>>
      memref.store %24, %arg4[%c0_18, %c0_19] : memref<1x2xf32, #tpu.memory_space<smem>>
      %c0_20 = arith.constant 0 : index
      %c0_21 = arith.constant 0 : index
      %26 = vector.load %arg6[%c0_20, %c0_21] : memref<8x128xf32, #tpu.memory_space<vmem>>, vector<8x128xf32>
      %27 = vector.shape_cast %26 : vector<8x128xf32> to vector<1x8x128xf32>
      %cst_22 = arith.constant dense<0.000000e+00> : vector<1xf32>
      %28 = vector.multi_reduction <add>, %27, %cst_22 [1, 2] : vector<1x8x128xf32> to vector<1xf32>
      %29 = vector.shape_cast %28 : vector<1xf32> to vector<1x1x1xf32>
      %30 = vector.extract %29[0, 0, 0] : f32 from vector<1x1x1xf32>
      %c0_23 = arith.constant 0 : index
      %c1 = arith.constant 1 : index
      %31 = memref.load %arg4[%c0_23, %c1] : memref<1x2xf32, #tpu.memory_space<smem>>
      memref.store %30, %arg4[%c0_23, %c1] : memref<1x2xf32, #tpu.memory_space<smem>>
    } else {
    }
    return
  }
  func.func @transform_0(%arg0: i32, %arg1: i32) -> (i32, i32) {
    %c1_i32 = arith.constant 1 : i32
    %0 = arith.muli %arg0, %c1_i32 : i32
    %1 = arith.addi %0, %arg1 : i32
    %c0_i32 = arith.constant 0 : i32
    %2 = arith.minsi %1, %c0_i32 : i32
    %c0_i32_0 = arith.constant 0 : i32
    %c0_i32_1 = arith.constant 0 : i32
    return %2, %c0_i32_0 : i32, i32
  }
  func.func @transform_1(%arg0: i32, %arg1: i32) -> (i32, i32) {
    %c1_i32 = arith.constant 1 : i32
    %0 = arith.muli %arg0, %c1_i32 : i32
    %1 = arith.addi %0, %arg1 : i32
    %c0_i32 = arith.constant 0 : i32
    %2 = arith.minsi %1, %c0_i32 : i32
    %c0_i32_0 = arith.constant 0 : i32
    %c0_i32_1 = arith.constant 0 : i32
    return %2, %c0_i32_0 : i32, i32
  }
  func.func @transform_2(%arg0: i32, %arg1: i32) -> (i32, i32) {
    %c0_i32 = arith.constant 0 : i32
    %c0_i32_0 = arith.constant 0 : i32
    return %arg0, %c0_i32 : i32, i32
  }
}

</mosaic_0001>

<llo_original>
// kernel: tpu_custom_call.1
$region0: #{tpu_custom_call.1}
  #allocation0 [shape = 'u32[]', space=smem, size = 0x4, offset = 0x4, fixed_abs, tag = 'smem constant byte address 0x4 - core index']
  #allocation1 [shape = 'u32[144,128]{1,0:T(1,128)}', space=vmem, size = 0x12000, scoped, tag = 'internal scratch']
  #allocation2 [shape = 'f32[8,128]{1,0:T(8,128)}', space=vmem, size = 0x1000, scoped, tag = 'scratch operand']
  #allocation3 [shape = 'f32[8,128]{1,0:T(8,128)}', space=vmem, size = 0x1000, scoped, tag = 'scratch operand']
  %s0 = inlined_call_operand.hbm [shape: f32[16,128], index: 0, kind: input, shape index: {}]
  %s1 = inlined_call_operand.hbm [shape: f32[16,128], index: 1, kind: input, shape index: {}]
  %s2 = inlined_call_operand.hbm [shape: f32[1,2], index: 2, kind: output, shape index: {}]
  %s3 = sld [smem:[#allocation0]]
  $region34: #{tpu_custom_call.1} parent=0
    _
  %s5 = ssub.s32 1, %s3
  %s6 = scalar_select 0, %s5, %s3
  $region1: #{tpu_custom_call.1} parent=0
    #allocation4 [shape = 'u8[8192]{0}', space=vmem, size = 0x2000, scoped, tag = 'input window, operand 0, single buffered']
    #allocation5 [shape = 's32[1]{0}', space=sflag, size = 0x4, scoped, tag = 'scoped memory for tpu_custom_call.1']
    #allocation6 [shape = 's32[1]{0}', space=sflag, size = 0x4, scoped, tag = 'scoped memory for tpu_custom_call.1']
    #allocation7 [shape = 'u8[8192]{0}', space=vmem, size = 0x2000, scoped, tag = 'input window, operand 1, single buffered']
    #allocation8 [shape = 's32[1]{0}', space=sflag, size = 0x4, scoped, tag = 'scoped memory for tpu_custom_call.1']
    #allocation9 [shape = 'u8[512]{0}', space=smem, size = 0x200, scoped, tag = 'output window, operand 0, single buffered']
    %7 = vsyncpa [#allocation5], 0
    %8 = vsyncpa [#allocation8], 0
    %9 = vsyncpa [#allocation6], 0
    // Predicated region
    $region2: #{tpu_custom_call.1} parent=1 // pred_check
      _
    $region3: #{tpu_custom_call.1} parent=1 // pred_check_branch
      %11 = sbr.rel (0) target = $region5
    $region4: #{tpu_custom_call.1} parent=1 // pred_region
      %s12 = sadd.s32 0, 0
      %p13 = scmp.lt.s32.totalorder %s12, 0
      %s14 = scalar_select %p13, %s12, 0
      %s15 = smul.u32 2, %s14
      %s17 = ssub.s32 256, 256
      %18 = vsyncadd [#allocation5], %s17
      %s19 = smul.addr %s15, 128
      %s20 = scalar_lea.hbm %s0, %s19
      %s21 = sshll.u32 [#allocation4], 4
      %s22 = int_to_ptr.vmem [resolvable:$true] %s21
      %27 = dma.hbm_to_vmem [thread:$0]  %s20, 256, %s22, [#allocation5], 128, 128, 8
    $region5: #{tpu_custom_call.1} parent=1 // pred_fallthru
      _
    // Predicated region
    $region6: #{tpu_custom_call.1} parent=1 // pred_check
      _
    $region7: #{tpu_custom_call.1} parent=1 // pred_check_branch
      %29 = sbr.rel (0) target = $region9
    $region8: #{tpu_custom_call.1} parent=1 // pred_region
      %s30 = sadd.s32 0, 0
      %p31 = scmp.lt.s32.totalorder %s30, 0
      %s32 = scalar_select %p31, %s30, 0
      %s33 = smul.u32 2, %s32
      %s35 = ssub.s32 256, 256
      %36 = vsyncadd [#allocation8], %s35
      %s37 = smul.addr %s33, 128
      %s38 = scalar_lea.hbm %s1, %s37
      %s39 = sshll.u32 [#allocation7], 4
      %s40 = int_to_ptr.vmem [resolvable:$true] %s39
      %45 = dma.hbm_to_vmem [thread:$0]  %s38, 256, %s40, [#allocation8], 128, 128, 8
    $region9: #{tpu_custom_call.1} parent=1 // pred_fallthru
      _
    // Predicated region
    $region10: #{tpu_custom_call.1} parent=1 // pred_check
      _
    $region11: #{tpu_custom_call.1} parent=1 // pred_check_branch
      %47 = sbr.rel (0) target = $region13
    $region12: #{tpu_custom_call.1} parent=1 // pred_region
      %48 = dma.done [#allocation5], 256
    $region13: #{tpu_custom_call.1} parent=1 // pred_fallthru
      _
    // Predicated region
    $region14: #{tpu_custom_call.1} parent=1 // pred_check
      _
    $region15: #{tpu_custom_call.1} parent=1 // pred_check_branch
      %50 = sbr.rel (0) target = $region17
    $region16: #{tpu_custom_call.1} parent=1 // pred_region
      %51 = dma.done [#allocation8], 256
    $region17: #{tpu_custom_call.1} parent=1 // pred_fallthru
      _
    %s52 = sadd.s32 0, 0
    %p53 = scmp.lt.s32.totalorder %s52, 0
    %s54 = scalar_select %p53, %s52, 0
    %s55 = smul.u32 2, %s54
    %s56 = sadd.s32 0, 0
    %p57 = scmp.lt.s32.totalorder %s56, 0
    %s58 = scalar_select %p57, %s56, 0
    %s59 = smul.u32 2, %s58
    %p60 = scmp.eq.s32.totalorder 0, 0
    // Predicated region
    $region18: #{tpu_custom_call.1} parent=1 // pred_check
      %p61 = pneg %p60
    $region19: #{tpu_custom_call.1} parent=1 // pred_check_branch
      %63 = sbr.rel (%p61) target = $region21
    $region20: #{tpu_custom_call.1} parent=1 // pred_region
      %64 = vst [vmem:[#allocation2] sm:$0xff] 0.0
      %65 = vst [vmem:[#allocation3] sm:$0xff] 0.0
    $region21: #{tpu_custom_call.1} parent=1 // pred_fallthru
      _
    %v66 = vld [vmem:[#allocation4] sm:$0xff]
    %v67 = vld [vmem:[#allocation4 + $0x8] sm:$0xff]
    %v68 = vld [vmem:[#allocation7] sm:$0xff]
    %v69 = vld [vmem:[#allocation7 + $0x8] sm:$0xff]
    %v70 = vmul.f32 %v68, %v66
    %v71 = vmul.f32 %v69, %v67
    %v72 = vadd.f32 %v68, %v66
    %v73 = vadd.f32 %v69, %v67
    %v74 = vld [vmem:[#allocation2] sm:$0xff]
    %v75 = vadd.f32 %v70, %v71
    %v76 = vadd.f32 %v74, %v75
    %77 = vst [vmem:[#allocation2] sm:$0xff] %v76
    %v78 = vld [vmem:[#allocation3] sm:$0xff]
    %v79 = vadd.f32 %v72, %v73
    %v80 = vadd.f32 %v78, %v79
    %81 = vst [vmem:[#allocation3] sm:$0xff] %v80
    // Predicated region
    $region22: #{tpu_custom_call.1} parent=1 // pred_check
      %p82 = pneg %p60
    $region23: #{tpu_custom_call.1} parent=1 // pred_check_branch
      %84 = sbr.rel (%p82) target = $region25
    $region24: #{tpu_custom_call.1} parent=1 // pred_region
      %v85 = vld [vmem:[#allocation2] sm:$0xff]
      %86 = vadd.xlane.f32.xlu0 %v85
      %v87 = vpop.xlane.xlu0 %86
      %v88 = vrot.slane %v87, 4
      %v89 = vadd.f32 %v87, %v88
      %v90 = vrot.slane %v89, 2
      %v91 = vadd.f32 %v89, %v90
      %v92 = vrot.slane %v91, 1
      %v93 = vadd.f32 %v91, %v92
      %s94 = vtos %v93
      %s95 = scalar_lea.smem [#allocation9], 0
      %96 = sst [smem:[%s95]] %s94
      %v97 = vld [vmem:[#allocation3] sm:$0xff]
      %98 = vadd.xlane.f32.xlu0 %v97
      %v99 = vpop.xlane.xlu0 %98
      %v100 = vrot.slane %v99, 4
      %v101 = vadd.f32 %v99, %v100
      %v102 = vrot.slane %v101, 2
      %v103 = vadd.f32 %v101, %v102
      %v104 = vrot.slane %v103, 1
      %v105 = vadd.f32 %v103, %v104
      %s106 = vtos %v105
      %s107 = scalar_lea.smem [#allocation9], 1
      %108 = sst [smem:[%s107]] %s106
    $region25: #{tpu_custom_call.1} parent=1 // pred_fallthru
      _
    // Predicated region
    $region26: #{tpu_custom_call.1} parent=1 // pred_check
      _
    $region27: #{tpu_custom_call.1} parent=1 // pred_check_branch
      %110 = sbr.rel (0) target = $region29
    $region28: #{tpu_custom_call.1} parent=1 // pred_region
      %s112 = ssub.s32 16, 16
      %113 = vsyncadd [#allocation6], %s112
      %116 = dma.smem_to_hbm [#allocation9], 16, %s2, [#allocation6]
    $region29: #{tpu_custom_call.1} parent=1 // pred_fallthru
      _
    // Predicated region
    $region30: #{tpu_custom_call.1} parent=1 // pred_check
      _
    $region31: #{tpu_custom_call.1} parent=1 // pred_check_branch
      %118 = sbr.rel (0) target = $region33
    $region32: #{tpu_custom_call.1} parent=1 // pred_region
      %119 = dma.done [#allocation6], 16
    $region33: #{tpu_custom_call.1} parent=1 // pred_fallthru
      _
    %120 = sfence
    %121 = vsyncpa [#allocation5], 1
    %122 = vsyncpa [#allocation8], 1
    %123 = vsyncpa [#allocation6], 1

</llo_original>
